<compile_context>
chip_gen: v6e
topology: v6e:2x2x1
jax: 0.10.0
libtpu: 0.0.40
codegen_flags: <defaults>
</compile_context>

<pallas_src>
import jax
import jax.numpy as jnp
from jax.experimental import pallas as pl
from jax.experimental.pallas import tpu as pltpu


def _round_up(n, m):
    return (n + m - 1) // m * m


def _pad_to(a, shape):
    pads = [(0, t - s) for s, t in zip(a.shape, shape)]
    if any(p for _, p in pads):
        a = jnp.pad(a, pads)
    return a


def _choose_batch_tiling(B, block_b):
    """Pick (block_b, Bp, n_tiles): block_b % 128 == 0, even n_tiles when possible.

    An even tile count lets the ("parallel",) batch axis split evenly across the
    two v7x TensorCores; it is harmless on single-TC v5e/v6e.
    """
    block_b = max(128, _round_up(block_b, 128))
    block_b = min(block_b, _round_up(B, 128))        # don't exceed the padded batch
    Bp = _round_up(B, block_b)
    n = Bp // block_b
    if n % 2 == 1:
        if n == 1 and block_b >= 256:
            # Split the single tile so both v7x TensorCores get work.
            block_b = max(128, (block_b // 2) // 128 * 128)
            Bp = _round_up(B, block_b)
            n = Bp // block_b
        if n % 2 == 1 and n > 1:
            Bp = _round_up(B, 2 * block_b)
            n = Bp // block_b
    return block_b, Bp, n


def toxicity_head(pooled, w1, b1, w2, b2, w3, b3, *, block_b=256):
    """logit = w3 . relu((x + relu(x @ w1 + b1)) @ w2 + b2) + b3.

    pooled: (B, H) f32 (frozen BERT pooler output).  w1: (H, H), w2: (H, H2)
    stored (in, out).  b1: (H,), b2: (H2,), w3: (H2,), b3: (1,).  Returns (B, 1).
    """
    B, H = pooled.shape
    H2 = w2.shape[1]
    Hp, H2p = _round_up(H, 128), _round_up(H2, 128)
    block_b, Bp, n_tiles = _choose_batch_tiling(B, block_b)

    # Activations stay f32 in HBM (cast to bf16 happens inside the kernel -> no
    # extra wrapper pass).  Padding is a no-op at real BERT sizes (768 / 384).
    x = _pad_to(pooled, (Bp, Hp))
    # Frozen weights: cast once to bf16 (static, amortized; halves weight DMA).
    w1_16 = _pad_to(w1, (Hp, Hp)).astype(jnp.bfloat16)
    w2_16 = _pad_to(w2, (Hp, H2p)).astype(jnp.bfloat16)
    # b1 | b2 | w3 packed into one lane-aligned f32 row.
    vec = jnp.concatenate(
        [_pad_to(b1, (Hp,)), _pad_to(b2, (H2p,)), _pad_to(w3, (H2p,))]
    ).reshape(1, Hp + 2 * H2p).astype(jnp.float32)
    b3_smem = b3.reshape(1).astype(jnp.float32)

    def kernel(x_ref, w1_ref, w2_ref, vec_ref, b3_ref, o_ref):
        b1_v = vec_ref[:, :Hp]                       # (1, Hp)   f32
        b2_v = vec_ref[:, Hp:Hp + H2p]               # (1, H2p)  f32
        w3_v = vec_ref[:, Hp + H2p:]                 # (1, H2p)  f32
        x_f32 = x_ref[...]                           # (TB, Hp)  f32
        x16 = x_f32.astype(jnp.bfloat16)             # in-kernel cast for the MXU
        h1 = jnp.dot(x16, w1_ref[...], preferred_element_type=jnp.float32)
        h1 = jnp.maximum(h1 + b1_v, 0.0)             # (TB, Hp)  f32
        z = x_f32 + h1                               # residual (dropout = identity)
        h2 = jnp.dot(z.astype(jnp.bfloat16), w2_ref[...],
                     preferred_element_type=jnp.float32)
        h2 = jnp.maximum(h2 + b2_v, 0.0)             # (TB, H2p) f32
        # Final (H2 -> 1) projection on the VPU; a tile-aligned f32 transpose
        # (XLU slot, overlapped) puts batch on lanes so the per-row sums form a
        # (1, TB) lane-dense row -> unmasked full-width stores.
        prod_t = jnp.transpose(h2 * w3_v)            # (H2p, TB) f32
        o_ref[...] = jnp.sum(prod_t, axis=0, keepdims=True) + b3_ref[0]

    grid_spec = pltpu.PrefetchScalarGridSpec(
        num_scalar_prefetch=0,
        grid=(n_tiles,),
        in_specs=[
            pl.BlockSpec((block_b, Hp), lambda i: (i, 0)),        # x batch tiles
            # Constant index maps keep W1 / W2 / vec resident in VMEM across the
            # whole grid (no re-DMA per step).
            pl.BlockSpec((Hp, Hp), lambda i: (0, 0)),              # W1 (resident)
            pl.BlockSpec((Hp, H2p), lambda i: (0, 0)),             # W2 (resident)
            pl.BlockSpec((1, Hp + 2 * H2p), lambda i: (0, 0)),     # b1|b2|w3 row
            pl.BlockSpec(memory_space=pltpu.MemorySpace.SMEM),     # b3 scalar
        ],
        out_specs=pl.BlockSpec((1, block_b), lambda i: (0, i)),    # lane-dense row
    )

    out = pl.pallas_call(
        kernel,
        out_shape=jax.ShapeDtypeStruct((1, Bp), jnp.float32),
        grid_spec=grid_spec,
        compiler_params=pltpu.CompilerParams(
            dimension_semantics=("parallel",),       # megacore-shard the batch
            vmem_limit_bytes=48 * 1024 * 1024,       # safe on v5e/v6e/v7x
        ),
    )(x, w1_16, w2_16, vec, b3_smem)
    # Padded batch rows hold bias-driven garbage -> always slice to the real B.
    return out[0, :B].reshape(B, 1)


def reference_head_bf16(pooled, w1, b1, w2, b2, w3, b3):
    """Plain-JAX reference with the kernel's bf16-operand / f32-accumulate precision."""
    h1 = jnp.maximum(
        jnp.dot(pooled.astype(jnp.bfloat16), w1.astype(jnp.bfloat16),
                preferred_element_type=jnp.float32) + b1[None, :], 0.0)
    z = pooled + h1                                   # f32 residual (matches kernel)
    h2 = jnp.maximum(
        jnp.dot(z.astype(jnp.bfloat16), w2.astype(jnp.bfloat16),
                preferred_element_type=jnp.float32) + b2[None, :], 0.0)
    return jnp.sum(h2 * w3[None, :], axis=-1, keepdims=True) + b3


def reference_head_f32(pooled, w1, b1, w2, b2, w3, b3):
    """Full-f32 reference of the PyTorch head math."""
    h1 = jnp.maximum(pooled @ w1 + b1[None, :], 0.0)
    h2 = jnp.maximum((pooled + h1) @ w2 + b2[None, :], 0.0)
    return h2 @ w3[:, None] + b3


if __name__ == "__main__":
    # Small stand-in sizes (real bert-base hidden size is 768; any 128-multiple
    # avoids padding entirely).
    B, H = 8, 256
    H2 = H // 2

    key = jax.random.PRNGKey(0)
    k_x, k_w1, k_b1, k_w2, k_b2, k_w3, k_b3 = jax.random.split(key, 7)

    # `pooled` stands in for the frozen BERT pooler output.
    # TODO(synk): the pretrained BertModel backbone/pooler itself is not reproduced.
    pooled = jax.random.normal(k_x, (B, H), dtype=jnp.float32)

    # Deterministic synthetic head parameters (Linear stored as (in, out)).
    w1 = jax.random.normal(k_w1, (H, H), dtype=jnp.float32) * (1.0 / H ** 0.5)
    b1 = jax.random.normal(k_b1, (H,), dtype=jnp.float32) * 0.01
    w2 = jax.random.normal(k_w2, (H, H2), dtype=jnp.float32) * (1.0 / H ** 0.5)
    b2 = jax.random.normal(k_b2, (H2,), dtype=jnp.float32) * 0.01
    w3 = jax.random.normal(k_w3, (H2,), dtype=jnp.float32) * (1.0 / H2 ** 0.5)
    b3 = jax.random.normal(k_b3, (1,), dtype=jnp.float32) * 0.01

    logit = toxicity_head(pooled, w1, b1, w2, b2, w3, b3, block_b=256)
    logit = jax.block_until_ready(logit)
    assert logit.shape == (B, 1)

    ref16 = reference_head_bf16(pooled, w1, b1, w2, b2, w3, b3)
    assert jnp.allclose(logit, ref16, atol=1e-2, rtol=1e-2), "mismatch vs bf16 ref"
    ref32 = reference_head_f32(pooled, w1, b1, w2, b2, w3, b3)
    assert jnp.allclose(logit, ref32, atol=5e-2, rtol=5e-2), "mismatch vs f32 ref"

    print("KERNEL_OK")
</pallas_src>

<mosaic_0001>
module attributes {stable_mosaic.version = 11 : i64} {
  func.func @kernel(%arg0: i32, %arg1: memref<128x256xf32, #tpu.memory_space<vmem>>, %arg2: memref<256x256xbf16, #tpu.memory_space<vmem>>, %arg3: memref<256x128xbf16, #tpu.memory_space<vmem>>, %arg4: memref<1x512xf32, #tpu.memory_space<vmem>>, %arg5: memref<1xf32, #tpu.memory_space<smem>>, %arg6: memref<1x128xf32, #tpu.memory_space<vmem>>) attributes {dimension_semantics = [#tpu.dimension_semantics<parallel>], iteration_bounds = array<i64: 1>, scalar_prefetch = 0 : i64, scratch_operands = 0 : i64, tpu.core_type = #tpu.core_type<tc>, window_params = [{transform_indices = @transform_0, window_bounds = array<i64: 128, 256>}, {pipeline_mode = #tpu.pipeline_mode<synchronous>, transform_indices = @transform_1, window_bounds = array<i64: 256, 256>}, {pipeline_mode = #tpu.pipeline_mode<synchronous>, transform_indices = @transform_2, window_bounds = array<i64: 256, 128>}, {pipeline_mode = #tpu.pipeline_mode<synchronous>, transform_indices = @transform_3, window_bounds = array<i64: 1, 512>}, {transform_indices = @transform_4, window_bounds = array<i64: 1>}, {transform_indices = @transform_5, window_bounds = array<i64: 1, 128>}]} {
    %c0 = arith.constant 0 : index
    %c0_0 = arith.constant 0 : index
    %0 = vector.load %arg4[%c0, %c0_0] : memref<1x512xf32, #tpu.memory_space<vmem>>, vector<1x256xf32>
    %c0_1 = arith.constant 0 : index
    %c256 = arith.constant 256 : index
    %1 = vector.load %arg4[%c0_1, %c256] : memref<1x512xf32, #tpu.memory_space<vmem>>, vector<1x128xf32>
    %c0_2 = arith.constant 0 : index
    %c384 = arith.constant 384 : index
    %2 = vector.load %arg4[%c0_2, %c384] : memref<1x512xf32, #tpu.memory_space<vmem>>, vector<1x128xf32>
    %c0_3 = arith.constant 0 : index
    %c0_4 = arith.constant 0 : index
    %3 = vector.load %arg1[%c0_3, %c0_4] : memref<128x256xf32, #tpu.memory_space<vmem>>, vector<128x256xf32>
    %4 = arith.truncf %3 : vector<128x256xf32> to vector<128x256xbf16>
    %c0_5 = arith.constant 0 : index
    %c0_6 = arith.constant 0 : index
    %5 = vector.load %arg2[%c0_5, %c0_6] : memref<256x256xbf16, #tpu.memory_space<vmem>>, vector<256x256xbf16>
    %cst = arith.constant dense<0.000000e+00> : vector<128x256xf32>
    %6 = tpu.matmul %4, %5, %cst {dimension_numbers = #tpu.dot_dimension_numbers<[1], [0], [0], [1], [0, 0, 1, 1], [], []>} : vector<128x256xbf16>, vector<256x256xbf16>, vector<128x256xf32> -> vector<128x256xf32>
    %7 = vector.broadcast %0 : vector<1x256xf32> to vector<128x256xf32>
    %8 = arith.addf %6, %7 : vector<128x256xf32>
    %cst_7 = arith.constant 0.000000e+00 : f32
    %9 = vector.broadcast %cst_7 : f32 to vector<128x256xf32>
    %10 = arith.maximumf %8, %9 : vector<128x256xf32>
    %11 = arith.addf %3, %10 : vector<128x256xf32>
    %12 = arith.truncf %11 : vector<128x256xf32> to vector<128x256xbf16>
    %c0_8 = arith.constant 0 : index
    %c0_9 = arith.constant 0 : index
    %13 = vector.load %arg3[%c0_8, %c0_9] : memref<256x128xbf16, #tpu.memory_space<vmem>>, vector<256x128xbf16>
    %cst_10 = arith.constant dense<0.000000e+00> : vector<128x128xf32>
    %14 = tpu.matmul %12, %13, %cst_10 {dimension_numbers = #tpu.dot_dimension_numbers<[1], [0], [0], [1], [0, 0, 1, 1], [], []>} : vector<128x256xbf16>, vector<256x128xbf16>, vector<128x128xf32> -> vector<128x128xf32>
    %15 = vector.broadcast %1 : vector<1x128xf32> to vector<128x128xf32>
    %16 = arith.addf %14, %15 : vector<128x128xf32>
    %cst_11 = arith.constant 0.000000e+00 : f32
    %17 = vector.broadcast %cst_11 : f32 to vector<128x128xf32>
    %18 = arith.maximumf %16, %17 : vector<128x128xf32>
    %19 = vector.broadcast %2 : vector<1x128xf32> to vector<128x128xf32>
    %20 = arith.mulf %18, %19 : vector<128x128xf32>
    %21 = tpu.transpose %20, [1, 0] : vector<128x128xf32> -> vector<128x128xf32>
    %cst_12 = arith.constant dense<0.000000e+00> : vector<128xf32>
    %22 = vector.multi_reduction <add>, %21, %cst_12 [0] : vector<128x128xf32> to vector<128xf32>
    %23 = vector.shape_cast %22 : vector<128xf32> to vector<1x128xf32>
    %c0_13 = arith.constant 0 : index
    %24 = memref.load %arg5[%c0_13] : memref<1xf32, #tpu.memory_space<smem>>
    %25 = vector.broadcast %24 : f32 to vector<1x128xf32>
    %26 = arith.addf %23, %25 : vector<1x128xf32>
    %c0_14 = arith.constant 0 : index
    %c0_15 = arith.constant 0 : index
    %27 = vector.load %arg6[%c0_14, %c0_15] : memref<1x128xf32, #tpu.memory_space<vmem>>, vector<1x128xf32>
    tpu.vector_store %arg6[%c0_14, %c0_15], %26 {strides = array<i32>} : memref<1x128xf32, #tpu.memory_space<vmem>>, vector<1x128xf32>,
    return
  }
  func.func @transform_0(%arg0: i32) -> (i32, i32) {
    %c0_i32 = arith.constant 0 : i32
    %c0_i32_0 = arith.constant 0 : i32
    return %arg0, %c0_i32 : i32, i32
  }
  func.func @transform_1(%arg0: i32) -> (i32, i32) {
    %c0_i32 = arith.constant 0 : i32
    %c0_i32_0 = arith.constant 0 : i32
    %c0_i32_1 = arith.constant 0 : i32
    return %c0_i32, %c0_i32_0 : i32, i32
  }
  func.func @transform_2(%arg0: i32) -> (i32, i32) {
    %c0_i32 = arith.constant 0 : i32
    %c0_i32_0 = arith.constant 0 : i32
    %c0_i32_1 = arith.constant 0 : i32
    return %c0_i32, %c0_i32_0 : i32, i32
  }
  func.func @transform_3(%arg0: i32) -> (i32, i32) {
    %c0_i32 = arith.constant 0 : i32
    %c0_i32_0 = arith.constant 0 : i32
    %c0_i32_1 = arith.constant 0 : i32
    return %c0_i32, %c0_i32_0 : i32, i32
  }
  func.func @transform_4(%arg0: i32) -> i32 {
    %c0_i32 = arith.constant 0 : i32
    %c0_i32_0 = arith.constant 0 : i32
    return %c0_i32 : i32
  }
  func.func @transform_5(%arg0: i32) -> (i32, i32) {
    %c0_i32 = arith.constant 0 : i32
    %c0_i32_0 = arith.constant 0 : i32
    return %c0_i32, %arg0 : i32, i32
  }
}

</mosaic_0001>

<llo_original>
// kernel: tpu_custom_call.1
$region0: #{tpu_custom_call.1}
  #allocation0 [shape = 'u32[]', space=smem, size = 0x4, offset = 0x4, fixed_abs, tag = 'smem constant byte address 0x4 - core index']
  #allocation1 [shape = 'u32[144,128]{1,0:T(1,128)}', space=vmem, size = 0x12000, scoped, tag = 'internal scratch']
  #allocation2 [shape = 'f32[1]{0:T(128)S(6)}', space=smem, size = 0x200, scoped, tag = 'scoped memory for tpu_custom_call.1']
  %s0 = inlined_call_operand.hbm [shape: f32[128,256], index: 0, kind: input, shape index: {}]
  %s1 = inlined_call_operand.hbm [shape: bf16[256,256], index: 1, kind: input, shape index: {}]
  %s2 = inlined_call_operand.hbm [shape: bf16[256,128], index: 2, kind: input, shape index: {}]
  %s3 = inlined_call_operand.vmem [shape: f32[1,512], index: 3, kind: input, shape index: {}]
  %s4 = inlined_call_operand.<no memory space> [shape: f32[1], index: 4, kind: input, shape index: {}]
  %s5 = inlined_call_operand.hbm [shape: f32[1,128], index: 5, kind: output, shape index: {}]
  %s6 = sld [smem:[#allocation0]]
  $region42: #{tpu_custom_call.1} parent=0
    _
  %s8 = ssub.s32 1, %s6
  %s9 = scalar_select 0, %s8, %s6
  %10 = sst [smem:[#allocation2]] %s4
  $region1: #{tpu_custom_call.1} parent=0
    #allocation3 [shape = 'u8[131072]{0}', space=vmem, size = 0x20000, scoped, tag = 'input window, operand 0, single buffered']
    #allocation4 [shape = 's32[1]{0}', space=sflag, size = 0x4, scoped, tag = 'scoped memory for tpu_custom_call.1']
    #allocation5 [shape = 's32[1]{0}', space=sflag, size = 0x4, scoped, tag = 'scoped memory for tpu_custom_call.1']
    #allocation6 [shape = 'u8[131072]{0}', space=vmem, size = 0x20000, scoped, tag = 'input window, operand 1, single buffered']
    #allocation7 [shape = 's32[1]{0}', space=sflag, size = 0x4, scoped, tag = 'scoped memory for tpu_custom_call.1']
    #allocation8 [shape = 'u8[65536]{0}', space=vmem, size = 0x10000, scoped, tag = 'input window, operand 2, single buffered']
    #allocation9 [shape = 'u8[512]{0}', space=vmem, size = 0x400, scoped, tag = 'output window, operand 0, single buffered']
    %11 = vsyncpa [#allocation4], 0
    %12 = vsyncpa [#allocation7], 0
    %13 = vsyncpa [#allocation5], 0
    // Predicated region
    $region2: #{tpu_custom_call.1} parent=1 // pred_check
      _
    $region3: #{tpu_custom_call.1} parent=1 // pred_check_branch
      %15 = sbr.rel (0) target = $region5
    $region4: #{tpu_custom_call.1} parent=1 // pred_region
      %s17 = ssub.s32 4096, 4096
      %18 = vsyncadd [#allocation4], %s17
      %s19 = sshll.u32 [#allocation3], 4
      %s20 = int_to_ptr.vmem [resolvable:$true] %s19
      %25 = dma.hbm_to_vmem [thread:$0]  %s0, 4096, %s20, [#allocation4], 256, 256, 16
    $region5: #{tpu_custom_call.1} parent=1 // pred_fallthru
      _
    // Predicated region
    $region6: #{tpu_custom_call.1} parent=1 // pred_check
      _
    $region7: #{tpu_custom_call.1} parent=1 // pred_check_branch
      %27 = sbr.rel (0) target = $region9
    $region8: #{tpu_custom_call.1} parent=1 // pred_region
      %s29 = ssub.s32 4096, 4096
      %30 = vsyncadd [#allocation7], %s29
      %s31 = sshll.u32 [#allocation6], 4
      %s32 = int_to_ptr.vmem [resolvable:$true] %s31
      %37 = dma.hbm_to_vmem [thread:$0]  %s1, 4096, %s32, [#allocation7], 128, 128, 8
    $region9: #{tpu_custom_call.1} parent=1 // pred_fallthru
      _
    // Predicated region
    $region10: #{tpu_custom_call.1} parent=1 // pred_check
      _
    $region11: #{tpu_custom_call.1} parent=1 // pred_check_branch
      %39 = sbr.rel (0) target = $region13
    $region12: #{tpu_custom_call.1} parent=1 // pred_region
      %s41 = ssub.s32 2048, 2048
      %42 = vsyncadd [#allocation7], %s41
      %s43 = sshll.u32 [#allocation8], 4
      %s44 = int_to_ptr.vmem [resolvable:$true] %s43
      %49 = dma.hbm_to_vmem [thread:$0]  %s2, 2048, %s44, [#allocation7], 64, 64, 4
    $region13: #{tpu_custom_call.1} parent=1 // pred_fallthru
      _
    // Predicated region
    $region14: #{tpu_custom_call.1} parent=1 // pred_check
      _
    $region15: #{tpu_custom_call.1} parent=1 // pred_check_branch
      %51 = sbr.rel (0) target = $region17
    $region16: #{tpu_custom_call.1} parent=1 // pred_region
      _
    $region17: #{tpu_custom_call.1} parent=1 // pred_fallthru
      _
    // Predicated region
    $region18: #{tpu_custom_call.1} parent=1 // pred_check
      _
    $region19: #{tpu_custom_call.1} parent=1 // pred_check_branch
      %53 = sbr.rel (0) target = $region21
    $region20: #{tpu_custom_call.1} parent=1 // pred_region
      _
    $region21: #{tpu_custom_call.1} parent=1 // pred_fallthru
      _
    // Predicated region
    $region22: #{tpu_custom_call.1} parent=1 // pred_check
      _
    $region23: #{tpu_custom_call.1} parent=1 // pred_check_branch
      %55 = sbr.rel (0) target = $region25
    $region24: #{tpu_custom_call.1} parent=1 // pred_region
      %56 = dma.done [#allocation4], 4096
    $region25: #{tpu_custom_call.1} parent=1 // pred_fallthru
      _
    // Predicated region
    $region26: #{tpu_custom_call.1} parent=1 // pred_check
      _
    $region27: #{tpu_custom_call.1} parent=1 // pred_check_branch
      %58 = sbr.rel (0) target = $region29
    $region28: #{tpu_custom_call.1} parent=1 // pred_region
      %59 = dma.done [#allocation7], 4096
    $region29: #{tpu_custom_call.1} parent=1 // pred_fallthru
      _
    // Predicated region
    $region30: #{tpu_custom_call.1} parent=1 // pred_check
      _
    $region31: #{tpu_custom_call.1} parent=1 // pred_check_branch
      %61 = sbr.rel (0) target = $region33
    $region32: #{tpu_custom_call.1} parent=1 // pred_region
      %62 = dma.done [#allocation7], 2048
    $region33: #{tpu_custom_call.1} parent=1 // pred_fallthru
      _
    %v64 = vld [vmem:[%s3] sm:$0x3]
    %v65 = vld [vmem:[%s3 + $0x2] sm:$0x1]
    %v66 = vld [vmem:[%s3 + $0x3] sm:$0x1]
    %v67 = vld [vmem:[#allocation3] sm:$0xff]
    %v68 = vld [vmem:[#allocation3 + $0x8] sm:$0xff]
    %v69 = vld [vmem:[#allocation3 + $0x10] sm:$0xff]
    %v70 = vld [vmem:[#allocation3 + $0x18] sm:$0xff]
    %v71 = vld [vmem:[#allocation3 + $0x20] sm:$0xff]
    %v72 = vld [vmem:[#allocation3 + $0x28] sm:$0xff]
    %v73 = vld [vmem:[#allocation3 + $0x30] sm:$0xff]
    %v74 = vld [vmem:[#allocation3 + $0x38] sm:$0xff]
    %v75 = vld [vmem:[#allocation3 + $0x40] sm:$0xff]
    %v76 = vld [vmem:[#allocation3 + $0x48] sm:$0xff]
    %v77 = vld [vmem:[#allocation3 + $0x50] sm:$0xff]
    %v78 = vld [vmem:[#allocation3 + $0x58] sm:$0xff]
    %v79 = vld [vmem:[#allocation3 + $0x60] sm:$0xff]
    %v80 = vld [vmem:[#allocation3 + $0x68] sm:$0xff]
    %v81 = vld [vmem:[#allocation3 + $0x70] sm:$0xff]
    %v82 = vld [vmem:[#allocation3 + $0x78] sm:$0xff]
    %v83 = vld [vmem:[#allocation3 + $0x80] sm:$0xff]
    %v84 = vld [vmem:[#allocation3 + $0x88] sm:$0xff]
    %v85 = vld [vmem:[#allocation3 + $0x90] sm:$0xff]
    %v86 = vld [vmem:[#allocation3 + $0x98] sm:$0xff]
    %v87 = vld [vmem:[#allocation3 + $0xa0] sm:$0xff]
    %v88 = vld [vmem:[#allocation3 + $0xa8] sm:$0xff]
    %v89 = vld [vmem:[#allocation3 + $0xb0] sm:$0xff]
    %v90 = vld [vmem:[#allocation3 + $0xb8] sm:$0xff]
    %v91 = vld [vmem:[#allocation3 + $0xc0] sm:$0xff]
    %v92 = vld [vmem:[#allocation3 + $0xc8] sm:$0xff]
    %v93 = vld [vmem:[#allocation3 + $0xd0] sm:$0xff]
    %v94 = vld [vmem:[#allocation3 + $0xd8] sm:$0xff]
    %v95 = vld [vmem:[#allocation3 + $0xe0] sm:$0xff]
    %v96 = vld [vmem:[#allocation3 + $0xe8] sm:$0xff]
    %v97 = vld [vmem:[#allocation3 + $0xf0] sm:$0xff]
    %v98 = vld [vmem:[#allocation3 + $0xf8] sm:$0xff]
    %v99 = vpack.c.bf16 %v69, %v67
    %v100 = vpack.c.bf16 %v70, %v68
    %v101 = vpack.c.bf16 %v73, %v71
    %v102 = vpack.c.bf16 %v74, %v72
    %v103 = vpack.c.bf16 %v77, %v75
    %v104 = vpack.c.bf16 %v78, %v76
    %v105 = vpack.c.bf16 %v81, %v79
    %v106 = vpack.c.bf16 %v82, %v80
    %v107 = vpack.c.bf16 %v85, %v83
    %v108 = vpack.c.bf16 %v86, %v84
    %v109 = vpack.c.bf16 %v89, %v87
    %v110 = vpack.c.bf16 %v90, %v88
    %v111 = vpack.c.bf16 %v93, %v91
    %v112 = vpack.c.bf16 %v94, %v92
    %v113 = vpack.c.bf16 %v97, %v95
    %v114 = vpack.c.bf16 %v98, %v96
    %v115 = vld [vmem:[#allocation6] sm:$0xff]
    %v116 = vld [vmem:[#allocation6 + $0x8] sm:$0xff]
    %v117 = vld [vmem:[#allocation6 + $0x10] sm:$0xff]
    %v118 = vld [vmem:[#allocation6 + $0x18] sm:$0xff]
    %v119 = vld [vmem:[#allocation6 + $0x20] sm:$0xff]
    %v120 = vld [vmem:[#allocation6 + $0x28] sm:$0xff]
    %v121 = vld [vmem:[#allocation6 + $0x30] sm:$0xff]
    %v122 = vld [vmem:[#allocation6 + $0x38] sm:$0xff]
    %v123 = vld [vmem:[#allocation6 + $0x40] sm:$0xff]
    %v124 = vld [vmem:[#allocation6 + $0x48] sm:$0xff]
    %v125 = vld [vmem:[#allocation6 + $0x50] sm:$0xff]
    %v126 = vld [vmem:[#allocation6 + $0x58] sm:$0xff]
    %v127 = vld [vmem:[#allocation6 + $0x60] sm:$0xff]
    %v128 = vld [vmem:[#allocation6 + $0x68] sm:$0xff]
    %v129 = vld [vmem:[#allocation6 + $0x70] sm:$0xff]
    %v130 = vld [vmem:[#allocation6 + $0x78] sm:$0xff]
    %v131 = vld [vmem:[#allocation6 + $0x80] sm:$0xff]
    %v132 = vld [vmem:[#allocation6 + $0x88] sm:$0xff]
    %v133 = vld [vmem:[#allocation6 + $0x90] sm:$0xff]
    %v134 = vld [vmem:[#allocation6 + $0x98] sm:$0xff]
    %v135 = vld [vmem:[#allocation6 + $0xa0] sm:$0xff]
    %v136 = vld [vmem:[#allocation6 + $0xa8] sm:$0xff]
    %v137 = vld [vmem:[#allocation6 + $0xb0] sm:$0xff]
    %v138 = vld [vmem:[#allocation6 + $0xb8] sm:$0xff]
    %v139 = vld [vmem:[#allocation6 + $0xc0] sm:$0xff]
    %v140 = vld [vmem:[#allocation6 + $0xc8] sm:$0xff]
    %v141 = vld [vmem:[#allocation6 + $0xd0] sm:$0xff]
    %v142 = vld [vmem:[#allocation6 + $0xd8] sm:$0xff]
    %v143 = vld [vmem:[#allocation6 + $0xe0] sm:$0xff]
    %v144 = vld [vmem:[#allocation6 + $0xe8] sm:$0xff]
    %v145 = vld [vmem:[#allocation6 + $0xf0] sm:$0xff]
    %v146 = vld [vmem:[#allocation6 + $0xf8] sm:$0xff]
    %v148 = vlaneseq
    %v149 = vshrl.u32 %v148, 7
    %v150 = vsub.s32 0, %v149
    %v151 = vrot.slane %v64, %v150
    %v152 = vlaneseq
    %v153 = vshrl.u32 %v152, 7
    %v154 = vsub.s32 1, %v153
    %v155 = vrot.slane %v64, %v154
    %v190 = vunpack.c.l.b16 %v115
    %v191 = vunpack.c.h.b16 %v115
    %v192 = vunpack.c.l.b16 %v116
    %v193 = vunpack.c.h.b16 %v116
    %v194 = vunpack.c.l.b16 %v117
    %v195 = vunpack.c.h.b16 %v117
    %v196 = vunpack.c.l.b16 %v118
    %v197 = vunpack.c.h.b16 %v118
    %v198 = vunpack.c.l.b16 %v119
    %v199 = vunpack.c.h.b16 %v119
    %v200 = vunpack.c.l.b16 %v120
    %v201 = vunpack.c.h.b16 %v120
    %v202 = vunpack.c.l.b16 %v121
    %v203 = vunpack.c.h.b16 %v121
    %v204 = vunpack.c.l.b16 %v122
    %v205 = vunpack.c.h.b16 %v122
    %v206 = vunpack.c.l.b16 %v123
    %v207 = vunpack.c.h.b16 %v123
    %v208 = vunpack.c.l.b16 %v124
    %v209 = vunpack.c.h.b16 %v124
    %v210 = vunpack.c.l.b16 %v125
    %v211 = vunpack.c.h.b16 %v125
    %v212 = vunpack.c.l.b16 %v126
    %v213 = vunpack.c.h.b16 %v126
    %v214 = vunpack.c.l.b16 %v127
    %v215 = vunpack.c.h.b16 %v127
    %v216 = vunpack.c.l.b16 %v128
    %v217 = vunpack.c.h.b16 %v128
    %v218 = vunpack.c.l.b16 %v129
    %v219 = vunpack.c.h.b16 %v129
    %v220 = vunpack.c.l.b16 %v130
    %v221 = vunpack.c.h.b16 %v130
    %v222 = vunpack.c.l.b16 %v131
    %v223 = vunpack.c.h.b16 %v131
    %v224 = vunpack.c.l.b16 %v132
    %v225 = vunpack.c.h.b16 %v132
    %v226 = vunpack.c.l.b16 %v133
    %v227 = vunpack.c.h.b16 %v133
    %v228 = vunpack.c.l.b16 %v134
    %v229 = vunpack.c.h.b16 %v134
    %v230 = vunpack.c.l.b16 %v135
    %v231 = vunpack.c.h.b16 %v135
    %v232 = vunpack.c.l.b16 %v136
    %v233 = vunpack.c.h.b16 %v136
    %v234 = vunpack.c.l.b16 %v137
    %v235 = vunpack.c.h.b16 %v137
    %v236 = vunpack.c.l.b16 %v138
    %v237 = vunpack.c.h.b16 %v138
    %v238 = vunpack.c.l.b16 %v139
    %v239 = vunpack.c.h.b16 %v139
    %v240 = vunpack.c.l.b16 %v140
    %v241 = vunpack.c.h.b16 %v140
    %v242 = vunpack.c.l.b16 %v141
    %v243 = vunpack.c.h.b16 %v141
    %v244 = vunpack.c.l.b16 %v142
    %v245 = vunpack.c.h.b16 %v142
    %v246 = vunpack.c.l.b16 %v143
    %v247 = vunpack.c.h.b16 %v143
    %v248 = vunpack.c.l.b16 %v144
    %v249 = vunpack.c.h.b16 %v144
    %v250 = vunpack.c.l.b16 %v145
    %v251 = vunpack.c.h.b16 %v145
    %v252 = vunpack.c.l.b16 %v146
    %v253 = vunpack.c.h.b16 %v146
    %v254 = vpack.c.b16 %v192, %v190
    %v255 = vpack.c.b16 %v193, %v191
    %v256 = vpack.c.b16 %v196, %v194
    %v257 = vpack.c.b16 %v197, %v195
    %v258 = vpack.c.b16 %v200, %v198
    %v259 = vpack.c.b16 %v201, %v199
    %v260 = vpack.c.b16 %v204, %v202
    %v261 = vpack.c.b16 %v205, %v203
    %v262 = vpack.c.b16 %v208, %v206
    %v263 = vpack.c.b16 %v209, %v207
    %v264 = vpack.c.b16 %v212, %v210
    %v265 = vpack.c.b16 %v213, %v211
    %v266 = vpack.c.b16 %v216, %v214
    %v267 = vpack.c.b16 %v217, %v215
    %v268 = vpack.c.b16 %v220, %v218
    %v269 = vpack.c.b16 %v221, %v219
    %v270 = vpack.c.b16 %v224, %v222
    %v271 = vpack.c.b16 %v225, %v223
    %v272 = vpack.c.b16 %v228, %v226
    %v273 = vpack.c.b16 %v229, %v227
    %v274 = vpack.c.b16 %v232, %v230
    %v275 = vpack.c.b16 %v233, %v231
    %v276 = vpack.c.b16 %v236, %v234
    %v277 = vpack.c.b16 %v237, %v235
    %v278 = vpack.c.b16 %v240, %v238
    %v279 = vpack.c.b16 %v241, %v239
    %v280 = vpack.c.b16 %v244, %v242
    %v281 = vpack.c.b16 %v245, %v243
    %v282 = vpack.c.b16 %v248, %v246
    %v283 = vpack.c.b16 %v249, %v247
    %v284 = vpack.c.b16 %v252, %v250
    %v285 = vpack.c.b16 %v253, %v251
    %318 = vmatprep.subr.bf16.mxu0 %v269
    %319 = vmatpush1.bf16.msra.mxu0 %v268
    %320 = vmatprep.subr.bf16.mxu0 %v267
    %321 = vmatpush1.bf16.msra.mxu0 %v266
    %322 = vmatprep.subr.bf16.mxu0 %v265
    %323 = vmatpush1.bf16.msra.mxu0 %v264
    %324 = vmatprep.subr.bf16.mxu0 %v263
    %325 = vmatpush1.bf16.msra.mxu0 %v262
    %326 = vmatprep.subr.bf16.mxu0 %v261
    %327 = vmatpush1.bf16.msra.mxu0 %v260
    %328 = vmatprep.subr.bf16.mxu0 %v259
    %329 = vmatpush1.bf16.msra.mxu0 %v258
    %330 = vmatprep.subr.bf16.mxu0 %v257
    %331 = vmatpush1.bf16.msra.mxu0 %v256
    %332 = vmatprep.subr.bf16.mxu0 %v255
    %333 = vmatpush1.bf16.msra.mxu0 %v254
    %334 = vmatprep.subr.bf16.mxu0 %v285
    %335 = vmatpush2.bf16.msra.mxu0 %v284
    %336 = vmatprep.subr.bf16.mxu0 %v283
    %337 = vmatpush2.bf16.msra.mxu0 %v282
    %338 = vmatprep.subr.bf16.mxu0 %v281
    %339 = vmatpush2.bf16.msra.mxu0 %v280
    %340 = vmatprep.subr.bf16.mxu0 %v279
    %341 = vmatpush2.bf16.msra.mxu0 %v278
    %342 = vmatprep.subr.bf16.mxu0 %v277
    %343 = vmatpush2.bf16.msra.mxu0 %v276
    %344 = vmatprep.subr.bf16.mxu0 %v275
    %345 = vmatpush2.bf16.msra.mxu0 %v274
    %346 = vmatprep.subr.bf16.mxu0 %v273
    %347 = vmatpush2.bf16.msra.mxu0 %v272
    %348 = vmatprep.subr.bf16.mxu0 %v271
    %349 = vmatpush2.bf16.msra.mxu0 %v270
    %350 = vmatprep.mubr.bf16.mxu0 %v100
    %351 = vmatmul.mubr.bf16.gmra.mxu0 %v99
    %v352 = vpop.f32.mrf.mxu0
    %v353 = vadd.f32 %v151, %v352
    %v354 = vpop.f32.mrf.mxu0
    %v355 = vadd.f32 %v155, %v354
    %v356 = vpop.f32.mrf.mxu0
    %v357 = vadd.f32 %v151, %v356
    %v358 = vpop.f32.mrf.mxu0
    %v359 = vadd.f32 %v155, %v358
    %360 = vmatprep.mubr.bf16.mxu0 %v102
    %361 = vmatmul.mubr.bf16.gmra.mxu0 %v101
    %v362 = vpop.f32.mrf.mxu0
    %v363 = vadd.f32 %v151, %v362
    %v364 = vpop.f32.mrf.mxu0
    %v365 = vadd.f32 %v155, %v364
    %v366 = vpop.f32.mrf.mxu0
    %v367 = vadd.f32 %v151, %v366
    %v368 = vpop.f32.mrf.mxu0
    %v369 = vadd.f32 %v155, %v368
    %370 = vmatprep.mubr.bf16.mxu0 %v104
    %371 = vmatmul.mubr.bf16.gmra.mxu0 %v103
    %v372 = vpop.f32.mrf.mxu0
    %v373 = vadd.f32 %v151, %v372
    %v374 = vpop.f32.mrf.mxu0
    %v375 = vadd.f32 %v155, %v374
    %v376 = vpop.f32.mrf.mxu0
    %v377 = vadd.f32 %v151, %v376
    %v378 = vpop.f32.mrf.mxu0
    %v379 = vadd.f32 %v155, %v378
    %380 = vmatprep.mubr.bf16.mxu0 %v106
    %381 = vmatmul.mubr.bf16.gmra.mxu0 %v105
    %v382 = vpop.f32.mrf.mxu0
    %v383 = vadd.f32 %v151, %v382
    %v384 = vpop.f32.mrf.mxu0
    %v385 = vadd.f32 %v155, %v384
    %v386 = vpop.f32.mrf.mxu0
    %v387 = vadd.f32 %v151, %v386
    %v388 = vpop.f32.mrf.mxu0
    %v389 = vadd.f32 %v155, %v388
    %390 = vmatprep.mubr.bf16.mxu0 %v108
    %391 = vmatmul.mubr.bf16.gmra.mxu0 %v107
    %v392 = vpop.f32.mrf.mxu0
    %v393 = vadd.f32 %v151, %v392
    %v394 = vpop.f32.mrf.mxu0
    %v395 = vadd.f32 %v155, %v394
    %v396 = vpop.f32.mrf.mxu0
    %v397 = vadd.f32 %v151, %v396
    %v398 = vpop.f32.mrf.mxu0
    %v399 = vadd.f32 %v155, %v398
    %400 = vmatprep.mubr.bf16.mxu0 %v110
    %401 = vmatmul.mubr.bf16.gmra.mxu0 %v109
    %v402 = vpop.f32.mrf.mxu0
    %v403 = vadd.f32 %v151, %v402
    %v404 = vpop.f32.mrf.mxu0
    %v405 = vadd.f32 %v155, %v404
    %v406 = vpop.f32.mrf.mxu0
    %v407 = vadd.f32 %v151, %v406
    %v408 = vpop.f32.mrf.mxu0
    %v409 = vadd.f32 %v155, %v408
    %410 = vmatprep.mubr.bf16.mxu0 %v112
    %411 = vmatmul.mubr.bf16.gmra.mxu0 %v111
    %v412 = vpop.f32.mrf.mxu0
    %v413 = vadd.f32 %v151, %v412
    %v414 = vpop.f32.mrf.mxu0
    %v415 = vadd.f32 %v155, %v414
    %v416 = vpop.f32.mrf.mxu0
    %v417 = vadd.f32 %v151, %v416
    %v418 = vpop.f32.mrf.mxu0
    %v419 = vadd.f32 %v155, %v418
    %420 = vmatprep.mubr.bf16.mxu0 %v114
    %421 = vmatmul.mubr.bf16.gmra.mxu0 %v113
    %v422 = vpop.f32.mrf.mxu0
    %v423 = vadd.f32 %v151, %v422
    %v424 = vpop.f32.mrf.mxu0
    %v425 = vadd.f32 %v155, %v424
    %v426 = vpop.f32.mrf.mxu0
    %v427 = vadd.f32 %v151, %v426
    %v428 = vpop.f32.mrf.mxu0
    %v429 = vadd.f32 %v155, %v428
    %430 = vdwg.mxu0
    %v431 = vmax.f32 %v353, 0.0
    %v432 = vmax.f32 %v355, 0.0
    %v433 = vmax.f32 %v357, 0.0
    %v434 = vmax.f32 %v359, 0.0
    %v435 = vmax.f32 %v363, 0.0
    %v436 = vmax.f32 %v365, 0.0
    %v437 = vmax.f32 %v367, 0.0
    %v438 = vmax.f32 %v369, 0.0
    %v439 = vmax.f32 %v373, 0.0
    %v440 = vmax.f32 %v375, 0.0
    %v441 = vmax.f32 %v377, 0.0
    %v442 = vmax.f32 %v379, 0.0
    %v443 = vmax.f32 %v383, 0.0
    %v444 = vmax.f32 %v385, 0.0
    %v445 = vmax.f32 %v387, 0.0
    %v446 = vmax.f32 %v389, 0.0
    %v447 = vmax.f32 %v393, 0.0
    %v448 = vmax.f32 %v395, 0.0
    %v449 = vmax.f32 %v397, 0.0
    %v450 = vmax.f32 %v399, 0.0
    %v451 = vmax.f32 %v403, 0.0
    %v452 = vmax.f32 %v405, 0.0
    %v453 = vmax.f32 %v407, 0.0
    %v454 = vmax.f32 %v409, 0.0
    %v455 = vmax.f32 %v413, 0.0
    %v456 = vmax.f32 %v415, 0.0
    %v457 = vmax.f32 %v417, 0.0
    %v458 = vmax.f32 %v419, 0.0
    %v459 = vmax.f32 %v423, 0.0
    %v460 = vmax.f32 %v425, 0.0
    %v461 = vmax.f32 %v427, 0.0
    %v462 = vmax.f32 %v429, 0.0
    %v463 = vadd.f32 %v67, %v431
    %v464 = vadd.f32 %v68, %v432
    %v465 = vadd.f32 %v69, %v433
    %v466 = vadd.f32 %v70, %v434
    %v467 = vadd.f32 %v71, %v435
    %v468 = vadd.f32 %v72, %v436
    %v469 = vadd.f32 %v73, %v437
    %v470 = vadd.f32 %v74, %v438
    %v471 = vadd.f32 %v75, %v439
    %v472 = vadd.f32 %v76, %v440
    %v473 = vadd.f32 %v77, %v441
    %v474 = vadd.f32 %v78, %v442
    %v475 = vadd.f32 %v79, %v443
    %v476 = vadd.f32 %v80, %v444
    %v477 = vadd.f32 %v81, %v445
    %v478 = vadd.f32 %v82, %v446
    %v479 = vadd.f32 %v83, %v447
    %v480 = vadd.f32 %v84, %v448
    %v481 = vadd.f32 %v85, %v449
    %v482 = vadd.f32 %v86, %v450
    %v483 = vadd.f32 %v87, %v451
    %v484 = vadd.f32 %v88, %v452
    %v485 = vadd.f32 %v89, %v453
    %v486 = vadd.f32 %v90, %v454
    %v487 = vadd.f32 %v91, %v455
    %v488 = vadd.f32 %v92, %v456
    %v489 = vadd.f32 %v93, %v457
    %v490 = vadd.f32 %v94, %v458
    %v491 = vadd.f32 %v95, %v459
    %v492 = vadd.f32 %v96, %v460
    %v493 = vadd.f32 %v97, %v461
    %v494 = vadd.f32 %v98, %v462
    %v495 = vpack.c.bf16 %v465, %v463
    %v496 = vpack.c.bf16 %v466, %v464
    %v497 = vpack.c.bf16 %v469, %v467
    %v498 = vpack.c.bf16 %v470, %v468
    %v499 = vpack.c.bf16 %v473, %v471
    %v500 = vpack.c.bf16 %v474, %v472
    %v501 = vpack.c.bf16 %v477, %v475
    %v502 = vpack.c.bf16 %v478, %v476
    %v503 = vpack.c.bf16 %v481, %v479
    %v504 = vpack.c.bf16 %v482, %v480
    %v505 = vpack.c.bf16 %v485, %v483
    %v506 = vpack.c.bf16 %v486, %v484
    %v507 = vpack.c.bf16 %v489, %v487
    %v508 = vpack.c.bf16 %v490, %v488
    %v509 = vpack.c.bf16 %v493, %v491
    %v510 = vpack.c.bf16 %v494, %v492
    %v511 = vld [vmem:[#allocation8] sm:$0xf]
    %v512 = vld [vmem:[#allocation8 + $0x4] sm:$0xf]
    %v513 = vld [vmem:[#allocation8 + $0x8] sm:$0xf]
    %v514 = vld [vmem:[#allocation8 + $0xc] sm:$0xf]
    %v515 = vld [vmem:[#allocation8 + $0x10] sm:$0xf]
    %v516 = vld [vmem:[#allocation8 + $0x14] sm:$0xf]
    %v517 = vld [vmem:[#allocation8 + $0x18] sm:$0xf]
    %v518 = vld [vmem:[#allocation8 + $0x1c] sm:$0xf]
    %v519 = vld [vmem:[#allocation8 + $0x20] sm:$0xf]
    %v520 = vld [vmem:[#allocation8 + $0x24] sm:$0xf]
    %v521 = vld [vmem:[#allocation8 + $0x28] sm:$0xf]
    %v522 = vld [vmem:[#allocation8 + $0x2c] sm:$0xf]
    %v523 = vld [vmem:[#allocation8 + $0x30] sm:$0xf]
    %v524 = vld [vmem:[#allocation8 + $0x34] sm:$0xf]
    %v525 = vld [vmem:[#allocation8 + $0x38] sm:$0xf]
    %v526 = vld [vmem:[#allocation8 + $0x3c] sm:$0xf]
    %v527 = vld [vmem:[#allocation8 + $0x40] sm:$0xf]
    %v528 = vld [vmem:[#allocation8 + $0x44] sm:$0xf]
    %v529 = vld [vmem:[#allocation8 + $0x48] sm:$0xf]
    %v530 = vld [vmem:[#allocation8 + $0x4c] sm:$0xf]
    %v531 = vld [vmem:[#allocation8 + $0x50] sm:$0xf]
    %v532 = vld [vmem:[#allocation8 + $0x54] sm:$0xf]
    %v533 = vld [vmem:[#allocation8 + $0x58] sm:$0xf]
    %v534 = vld [vmem:[#allocation8 + $0x5c] sm:$0xf]
    %v535 = vld [vmem:[#allocation8 + $0x60] sm:$0xf]
    %v536 = vld [vmem:[#allocation8 + $0x64] sm:$0xf]
    %v537 = vld [vmem:[#allocation8 + $0x68] sm:$0xf]
    %v538 = vld [vmem:[#allocation8 + $0x6c] sm:$0xf]
    %v539 = vld [vmem:[#allocation8 + $0x70] sm:$0xf]
    %v540 = vld [vmem:[#allocation8 + $0x74] sm:$0xf]
    %v541 = vld [vmem:[#allocation8 + $0x78] sm:$0xf]
    %v542 = vld [vmem:[#allocation8 + $0x7c] sm:$0xf]
    %v544 = vlaneseq
    %v545 = vshrl.u32 %v544, 7
    %v546 = vsub.s32 0, %v545
    %v547 = vrot.slane %v65, %v546
    %v581 = vunpack.c.l.b16 %v511
    %v582 = vunpack.c.l.b16 %v512
    %v583 = vunpack.c.l.b16 %v513
    %v584 = vunpack.c.l.b16 %v514
    %v585 = vunpack.c.l.b16 %v515
    %v586 = vunpack.c.l.b16 %v516
    %v587 = vunpack.c.l.b16 %v517
    %v588 = vunpack.c.l.b16 %v518
    %v589 = vunpack.c.l.b16 %v519
    %v590 = vunpack.c.l.b16 %v520
    %v591 = vunpack.c.l.b16 %v521
    %v592 = vunpack.c.l.b16 %v522
    %v593 = vunpack.c.l.b16 %v523
    %v594 = vunpack.c.l.b16 %v524
    %v595 = vunpack.c.l.b16 %v525
    %v596 = vunpack.c.l.b16 %v526
    %v597 = vunpack.c.l.b16 %v527
    %v598 = vunpack.c.l.b16 %v528
    %v599 = vunpack.c.l.b16 %v529
    %v600 = vunpack.c.l.b16 %v530
    %v601 = vunpack.c.l.b16 %v531
    %v602 = vunpack.c.l.b16 %v532
    %v603 = vunpack.c.l.b16 %v533
    %v604 = vunpack.c.l.b16 %v534
    %v605 = vunpack.c.l.b16 %v535
    %v606 = vunpack.c.l.b16 %v536
    %v607 = vunpack.c.l.b16 %v537
    %v608 = vunpack.c.l.b16 %v538
    %v609 = vunpack.c.l.b16 %v539
    %v610 = vunpack.c.l.b16 %v540
    %v611 = vunpack.c.l.b16 %v541
    %v612 = vunpack.c.l.b16 %v542
    %v613 = vpack.c.b16 %v582, %v581
    %v614 = vpack.c.b16 %v584, %v583
    %v615 = vpack.c.b16 %v586, %v585
    %v616 = vpack.c.b16 %v588, %v587
    %v617 = vpack.c.b16 %v590, %v589
    %v618 = vpack.c.b16 %v592, %v591
    %v619 = vpack.c.b16 %v594, %v593
    %v620 = vpack.c.b16 %v596, %v595
    %v621 = vpack.c.b16 %v598, %v597
    %v622 = vpack.c.b16 %v600, %v599
    %v623 = vpack.c.b16 %v602, %v601
    %v624 = vpack.c.b16 %v604, %v603
    %v625 = vpack.c.b16 %v606, %v605
    %v626 = vpack.c.b16 %v608, %v607
    %v627 = vpack.c.b16 %v610, %v609
    %v628 = vpack.c.b16 %v612, %v611
    %645 = vmatprep.subr.bf16.mxu0 0
    %646 = vmatpush1.bf16.msra.mxu0 %v620
    %647 = vmatprep.subr.bf16.mxu0 0
    %648 = vmatpush1.bf16.msra.mxu0 %v619
    %649 = vmatprep.subr.bf16.mxu0 0
    %650 = vmatpush1.bf16.msra.mxu0 %v618
    %651 = vmatprep.subr.bf16.mxu0 0
    %652 = vmatpush1.bf16.msra.mxu0 %v617
    %653 = vmatprep.subr.bf16.mxu0 0
    %654 = vmatpush1.bf16.msra.mxu0 %v616
    %655 = vmatprep.subr.bf16.mxu0 0
    %656 = vmatpush1.bf16.msra.mxu0 %v615
    %657 = vmatprep.subr.bf16.mxu0 0
    %658 = vmatpush1.bf16.msra.mxu0 %v614
    %659 = vmatprep.subr.bf16.mxu0 0
    %660 = vmatpush1.bf16.msra.mxu0 %v613
    %661 = vmatprep.subr.bf16.mxu0 0
    %662 = vmatpush2.bf16.msra.mxu0 %v628
    %663 = vmatprep.subr.bf16.mxu0 0
    %664 = vmatpush2.bf16.msra.mxu0 %v627
    %665 = vmatprep.subr.bf16.mxu0 0
    %666 = vmatpush2.bf16.msra.mxu0 %v626
    %667 = vmatprep.subr.bf16.mxu0 0
    %668 = vmatpush2.bf16.msra.mxu0 %v625
    %669 = vmatprep.subr.bf16.mxu0 0
    %670 = vmatpush2.bf16.msra.mxu0 %v624
    %671 = vmatprep.subr.bf16.mxu0 0
    %672 = vmatpush2.bf16.msra.mxu0 %v623
    %673 = vmatprep.subr.bf16.mxu0 0
    %674 = vmatpush2.bf16.msra.mxu0 %v622
    %675 = vmatprep.subr.bf16.mxu0 0
    %676 = vmatpush2.bf16.msra.mxu0 %v621
    %677 = vmatprep.mubr.bf16.mxu0 %v496
    %678 = vmatmul.mubr.bf16.gmra.mxu0 %v495
    %v679 = vpop.f32.mrf.mxu0
    %v680 = vadd.f32 %v547, %v679
    %v681 = vpop.f32.mrf.mxu0
    %v682 = vpop.f32.mrf.mxu0
    %v683 = vadd.f32 %v547, %v682
    %v684 = vpop.f32.mrf.mxu0
    %685 = vmatprep.mubr.bf16.mxu0 %v498
    %686 = vmatmul.mubr.bf16.gmra.mxu0 %v497
    %v687 = vpop.f32.mrf.mxu0
    %v688 = vadd.f32 %v547, %v687
    %v689 = vpop.f32.mrf.mxu0
    %v690 = vpop.f32.mrf.mxu0
    %v691 = vadd.f32 %v547, %v690
    %v692 = vpop.f32.mrf.mxu0
    %693 = vmatprep.mubr.bf16.mxu0 %v500
    %694 = vmatmul.mubr.bf16.gmra.mxu0 %v499
    %v695 = vpop.f32.mrf.mxu0
    %v696 = vadd.f32 %v547, %v695
    %v697 = vpop.f32.mrf.mxu0
    %v698 = vpop.f32.mrf.mxu0
    %v699 = vadd.f32 %v547, %v698
    %v700 = vpop.f32.mrf.mxu0
    %701 = vmatprep.mubr.bf16.mxu0 %v502
    %702 = vmatmul.mubr.bf16.gmra.mxu0 %v501
    %v703 = vpop.f32.mrf.mxu0
    %v704 = vadd.f32 %v547, %v703
    %v705 = vpop.f32.mrf.mxu0
    %v706 = vpop.f32.mrf.mxu0
    %v707 = vadd.f32 %v547, %v706
    %v708 = vpop.f32.mrf.mxu0
    %709 = vmatprep.mubr.bf16.mxu0 %v504
    %710 = vmatmul.mubr.bf16.gmra.mxu0 %v503
    %v711 = vpop.f32.mrf.mxu0
    %v712 = vadd.f32 %v547, %v711
    %v713 = vpop.f32.mrf.mxu0
    %v714 = vpop.f32.mrf.mxu0
    %v715 = vadd.f32 %v547, %v714
    %v716 = vpop.f32.mrf.mxu0
    %717 = vmatprep.mubr.bf16.mxu0 %v506
    %718 = vmatmul.mubr.bf16.gmra.mxu0 %v505
    %v719 = vpop.f32.mrf.mxu0
    %v720 = vadd.f32 %v547, %v719
    %v721 = vpop.f32.mrf.mxu0
    %v722 = vpop.f32.mrf.mxu0
    %v723 = vadd.f32 %v547, %v722
    %v724 = vpop.f32.mrf.mxu0
    %725 = vmatprep.mubr.bf16.mxu0 %v508
    %726 = vmatmul.mubr.bf16.gmra.mxu0 %v507
    %v727 = vpop.f32.mrf.mxu0
    %v728 = vadd.f32 %v547, %v727
    %v729 = vpop.f32.mrf.mxu0
    %v730 = vpop.f32.mrf.mxu0
    %v731 = vadd.f32 %v547, %v730
    %v732 = vpop.f32.mrf.mxu0
    %733 = vmatprep.mubr.bf16.mxu0 %v510
    %734 = vmatmul.mubr.bf16.gmra.mxu0 %v509
    %v735 = vpop.f32.mrf.mxu0
    %v736 = vadd.f32 %v547, %v735
    %v737 = vpop.f32.mrf.mxu0
    %v738 = vpop.f32.mrf.mxu0
    %v739 = vadd.f32 %v547, %v738
    %v740 = vpop.f32.mrf.mxu0
    %741 = vdwg.mxu0
    %v742 = vmax.f32 %v680, 0.0
    %v743 = vmax.f32 %v683, 0.0
    %v744 = vmax.f32 %v688, 0.0
    %v745 = vmax.f32 %v691, 0.0
    %v746 = vmax.f32 %v696, 0.0
    %v747 = vmax.f32 %v699, 0.0
    %v748 = vmax.f32 %v704, 0.0
    %v749 = vmax.f32 %v707, 0.0
    %v750 = vmax.f32 %v712, 0.0
    %v751 = vmax.f32 %v715, 0.0
    %v752 = vmax.f32 %v720, 0.0
    %v753 = vmax.f32 %v723, 0.0
    %v754 = vmax.f32 %v728, 0.0
    %v755 = vmax.f32 %v731, 0.0
    %v756 = vmax.f32 %v736, 0.0
    %v757 = vmax.f32 %v739, 0.0
    %v759 = vlaneseq
    %v760 = vshrl.u32 %v759, 7
    %v761 = vsub.s32 0, %v760
    %v762 = vrot.slane %v66, %v761
    %v764 = vmul.f32 %v742, %v762
    %v765 = vmul.f32 %v743, %v762
    %v766 = vmul.f32 %v744, %v762
    %v767 = vmul.f32 %v745, %v762
    %v768 = vmul.f32 %v746, %v762
    %v769 = vmul.f32 %v747, %v762
    %v770 = vmul.f32 %v748, %v762
    %v771 = vmul.f32 %v749, %v762
    %v772 = vmul.f32 %v750, %v762
    %v773 = vmul.f32 %v751, %v762
    %v774 = vmul.f32 %v752, %v762
    %v775 = vmul.f32 %v753, %v762
    %v776 = vmul.f32 %v754, %v762
    %v777 = vmul.f32 %v755, %v762
    %v778 = vmul.f32 %v756, %v762
    %v779 = vmul.f32 %v757, %v762
    %780 = vxpose.xlu0.b32.start [1/16] %v764, 128
    %781 = vxpose.xlu0.b32.cont [2/16] %v765, 128
    %782 = vxpose.xlu0.b32.cont [3/16] %v766, 128
    %783 = vxpose.xlu0.b32.cont [4/16] %v767, 128
    %784 = vxpose.xlu0.b32.cont [5/16] %v768, 128
    %785 = vxpose.xlu0.b32.cont [6/16] %v769, 128
    %786 = vxpose.xlu0.b32.cont [7/16] %v770, 128
    %787 = vxpose.xlu0.b32.cont [8/16] %v771, 128
    %788 = vxpose.xlu0.b32.cont [9/16] %v772, 128
    %789 = vxpose.xlu0.b32.cont [10/16] %v773, 128
    %790 = vxpose.xlu0.b32.cont [11/16] %v774, 128
    %791 = vxpose.xlu0.b32.cont [12/16] %v775, 128
    %792 = vxpose.xlu0.b32.cont [13/16] %v776, 128
    %793 = vxpose.xlu0.b32.cont [14/16] %v777, 128
    %794 = vxpose.xlu0.b32.cont [15/16] %v778, 128
    %795 = vxpose.xlu0.b32.end [16/16] %v779, 128
    %v796 = vpop.trf.xlu0
    %v797 = vpop.trf.xlu0
    %v798 = vpop.trf.xlu0
    %v799 = vpop.trf.xlu0
    %v800 = vpop.trf.xlu0
    %v801 = vpop.trf.xlu0
    %v802 = vpop.trf.xlu0
    %v803 = vpop.trf.xlu0
    %v804 = vpop.trf.xlu0
    %v805 = vpop.trf.xlu0
    %v806 = vpop.trf.xlu0
    %v807 = vpop.trf.xlu0
    %v808 = vpop.trf.xlu0
    %v809 = vpop.trf.xlu0
    %v810 = vpop.trf.xlu0
    %v811 = vpop.trf.xlu0
    %v812 = vadd.f32 %v796, %v797
    %v813 = vadd.f32 %v812, %v798
    %v814 = vadd.f32 %v813, %v799
    %v815 = vadd.f32 %v814, %v800
    %v816 = vadd.f32 %v815, %v801
    %v817 = vadd.f32 %v816, %v802
    %v818 = vadd.f32 %v817, %v803
    %v819 = vadd.f32 %v818, %v804
    %v820 = vadd.f32 %v819, %v805
    %v821 = vadd.f32 %v820, %v806
    %v822 = vadd.f32 %v821, %v807
    %v823 = vadd.f32 %v822, %v808
    %v824 = vadd.f32 %v823, %v809
    %v825 = vadd.f32 %v824, %v810
    %v826 = vadd.f32 %v825, %v811
    %v827 = vrot.slane %v826, 4
    %v828 = vadd.f32 %v826, %v827
    %v829 = vrot.slane %v828, 2
    %v830 = vadd.f32 %v828, %v829
    %v831 = vrot.slane %v830, 1
    %v832 = vadd.f32 %v830, %v831
    %s833 = sld [smem:[#allocation2]]
    %v834 = vstv %s833
    %v835 = vadd.f32 %v832, %v834
    %836 = vst [vmem:[#allocation9] sm:$0x1] %v835
    // Predicated region
    $region34: #{tpu_custom_call.1} parent=1 // pred_check
      _
    $region35: #{tpu_custom_call.1} parent=1 // pred_check_branch
      %838 = sbr.rel (0) target = $region37
    $region36: #{tpu_custom_call.1} parent=1 // pred_region
      %s840 = ssub.s32 16, 16
      %841 = vsyncadd [#allocation5], %s840
      %s843 = sshll.u32 [#allocation9], 4
      %s844 = int_to_ptr.vmem [resolvable:$true] %s843
      %846 = dma.vmem_to_hbm [thread:$0]  %s844, 16, %s5, [#allocation5]
    $region37: #{tpu_custom_call.1} parent=1 // pred_fallthru
      _
    // Predicated region
    $region38: #{tpu_custom_call.1} parent=1 // pred_check
      _
    $region39: #{tpu_custom_call.1} parent=1 // pred_check_branch
      %848 = sbr.rel (0) target = $region41
    $region40: #{tpu_custom_call.1} parent=1 // pred_region
      %849 = dma.done [#allocation5], 16
    $region41: #{tpu_custom_call.1} parent=1 // pred_fallthru
      _
    %850 = vsyncpa [#allocation4], 1
    %851 = vsyncpa [#allocation7], 1
    %852 = vsyncpa [#allocation5], 1

</llo_original>
